<compile_context>
chip_gen: v7x
topology: tpu7x:2x2x1
jax: 0.10.0
libtpu: 0.0.40
codegen_flags: <defaults>
</compile_context>

<pallas_src>
import functools
import math

import jax
import jax.numpy as jnp
from jax.experimental import pallas as pl
from jax.experimental.pallas import tpu as pltpu


def _ntuple4(padding):
    if isinstance(padding, int):
        return (padding,) * 4
    padding = tuple(int(p) for p in padding)
    assert len(padding) == 4, "ReflectionPad2d expects int or 4-tuple padding"
    return padding


# ---------------------------------------------------------------------------
# Pallas kernel: reflection-pad one (rows, H, W) block into (rows, Ho, Wo)
# ---------------------------------------------------------------------------
def _reflection_pad2d_kernel(x_ref, o_ref, *, pad_l, pad_r, pad_t, pad_b):
    x = x_ref[...]                                     # (rb, H, W)
    H, W = x.shape[1], x.shape[2]

    # --- reflect along W (lane axis): left cols [pad_l..1], right [W-2..W-1-pad_r]
    cols = [x[:, :, k:k + 1] for k in range(pad_l, 0, -1)]
    cols.append(x)
    cols += [x[:, :, k:k + 1] for k in range(W - 2, W - 2 - pad_r, -1)]
    xw = jnp.concatenate(cols, axis=2) if len(cols) > 1 else x

    # --- reflect along H (sublane axis); corners come for free since we pad
    #     the already W-padded intermediate.
    rows = [xw[:, k:k + 1, :] for k in range(pad_t, 0, -1)]
    rows.append(xw)
    rows += [xw[:, k:k + 1, :] for k in range(H - 2, H - 2 - pad_b, -1)]
    out = jnp.concatenate(rows, axis=1) if len(rows) > 1 else xw

    o_ref[...] = out


# ---------------------------------------------------------------------------
# Wrapper
# ---------------------------------------------------------------------------
def reflection_pad2d(x, padding):
    """Reflection-pad the last two dims of `x` (torch ReflectionPad2d semantics).

    NOTE: the original ReflectionPadNd.forward has a latent bug
    (`narrow(i, 1, pad[0])` instead of `p[0]`) that crashes for per-dim
    asymmetric pads; we implement the intended standard reflection semantics
    (identical for the uniform pads actually used in the module, and matching
    its ONNX symbolic 'reflect' Pad).
    """
    pad_l, pad_r, pad_t, pad_b = _ntuple4(padding)
    assert x.ndim >= 2
    H, W = int(x.shape[-2]), int(x.shape[-1])
    assert 0 <= pad_l < W and 0 <= pad_r < W, "reflection pad must be < W"
    assert 0 <= pad_t < H and 0 <= pad_b < H, "reflection pad must be < H"

    lead = tuple(int(d) for d in x.shape[:-2])
    R = int(math.prod(lead)) if lead else 1
    x3 = x.reshape(R, H, W)
    Ho, Wo = H + pad_t + pad_b, W + pad_l + pad_r

    if pad_l == pad_r == pad_t == pad_b == 0:
        return x

    # Rows (images) per grid step: largest divisor of R whose in+out block
    # footprint stays under a small VMEM budget (double-buffered by Pallas).
    bytes_per_row = (H * W + Ho * Wo) * x.dtype.itemsize
    budget = 4 * 1024 * 1024
    rb = 1
    for d in range(1, R + 1):
        if R % d == 0 and d * bytes_per_row <= budget:
            rb = d
    grid = (R // rb,)

    out = pl.pallas_call(
        functools.partial(_reflection_pad2d_kernel,
                          pad_l=pad_l, pad_r=pad_r, pad_t=pad_t, pad_b=pad_b),
        out_shape=jax.ShapeDtypeStruct((R, Ho, Wo), x.dtype),
        grid=grid,
        in_specs=[pl.BlockSpec((rb, H, W), lambda i: (i, 0, 0))],
        out_specs=pl.BlockSpec((rb, Ho, Wo), lambda i: (i, 0, 0)),
        compiler_params=pltpu.CompilerParams(
            dimension_semantics=("parallel",)),
    )(x3)
    return out.reshape(*lead, Ho, Wo)


class ReflectionPad2d:
    """Pallas-TPU equivalent of medtk ReflectionPad2d (pads last 2 dims)."""

    def __init__(self, padding):
        self.padding = _ntuple4(padding)

    def __call__(self, x):
        return reflection_pad2d(x, self.padding)

    def __repr__(self):
        return f"ReflectionPad2d({self.padding})"


if __name__ == "__main__":
    key = jax.random.PRNGKey(0)
    x = jax.random.normal(key, (2, 4, 16, 16), jnp.float32)   # NCHW

    # asymmetric padding (left, right, top, bottom)
    pad = (1, 2, 3, 4)
    y = ReflectionPad2d(pad)(x)
    jax.block_until_ready(y)
    ref = jnp.pad(x, ((0, 0), (0, 0), (pad[2], pad[3]), (pad[0], pad[1])),
                  mode="reflect")
    assert y.shape == (2, 4, 16 + 3 + 4, 16 + 1 + 2)
    assert bool(jnp.all(y == ref))

    # uniform padding, as used throughout the module (e.g. ReflectionPad*(3))
    y3 = ReflectionPad2d(3)(x)
    jax.block_until_ready(y3)
    ref3 = jnp.pad(x, ((0, 0), (0, 0), (3, 3), (3, 3)), mode="reflect")
    assert y3.shape == (2, 4, 22, 22)
    assert bool(jnp.all(y3 == ref3))

    print("KERNEL_OK")
</pallas_src>

<mosaic_0001>
module attributes {stable_mosaic.version = 11 : i64} {
  func.func @_reflection_pad2d_kernel(%arg0: i32, %arg1: memref<8x16x16xf32, #tpu.memory_space<vmem>>, %arg2: memref<8x23x19xf32, #tpu.memory_space<vmem>>) attributes {dimension_semantics = [#tpu.dimension_semantics<parallel>], iteration_bounds = array<i64: 1>, scalar_prefetch = 0 : i64, scratch_operands = 0 : i64, tpu.core_type = #tpu.core_type<tc>, window_params = [{transform_indices = @transform_0, window_bounds = array<i64: 8, 16, 16>}, {transform_indices = @transform_1, window_bounds = array<i64: 8, 23, 19>}]} {
    %c0 = arith.constant 0 : index
    %c0_0 = arith.constant 0 : index
    %c0_1 = arith.constant 0 : index
    %0 = vector.load %arg1[%c0, %c0_0, %c0_1] : memref<8x16x16xf32, #tpu.memory_space<vmem>>, vector<8x16x16xf32>
    %1 = vector.extract_strided_slice %0 {offsets = [0, 0, 1], sizes = [8, 16, 1], strides = [1, 1, 1]} : vector<8x16x16xf32> to vector<8x16x1xf32>
    %2 = vector.extract_strided_slice %0 {offsets = [0, 0, 14], sizes = [8, 16, 1], strides = [1, 1, 1]} : vector<8x16x16xf32> to vector<8x16x1xf32>
    %3 = vector.extract_strided_slice %0 {offsets = [0, 0, 13], sizes = [8, 16, 1], strides = [1, 1, 1]} : vector<8x16x16xf32> to vector<8x16x1xf32>
    %4 = tpu.concatenate %1, %0, %2, %3 in 2 : vector<8x16x1xf32>, vector<8x16x16xf32>, vector<8x16x1xf32>, vector<8x16x1xf32> -> vector<8x16x19xf32>
    %5 = vector.extract_strided_slice %4 {offsets = [0, 3, 0], sizes = [8, 1, 19], strides = [1, 1, 1]} : vector<8x16x19xf32> to vector<8x1x19xf32>
    %6 = vector.extract_strided_slice %4 {offsets = [0, 2, 0], sizes = [8, 1, 19], strides = [1, 1, 1]} : vector<8x16x19xf32> to vector<8x1x19xf32>
    %7 = vector.extract_strided_slice %4 {offsets = [0, 1, 0], sizes = [8, 1, 19], strides = [1, 1, 1]} : vector<8x16x19xf32> to vector<8x1x19xf32>
    %8 = vector.extract_strided_slice %4 {offsets = [0, 14, 0], sizes = [8, 1, 19], strides = [1, 1, 1]} : vector<8x16x19xf32> to vector<8x1x19xf32>
    %9 = vector.extract_strided_slice %4 {offsets = [0, 13, 0], sizes = [8, 1, 19], strides = [1, 1, 1]} : vector<8x16x19xf32> to vector<8x1x19xf32>
    %10 = vector.extract_strided_slice %4 {offsets = [0, 12, 0], sizes = [8, 1, 19], strides = [1, 1, 1]} : vector<8x16x19xf32> to vector<8x1x19xf32>
    %11 = vector.extract_strided_slice %4 {offsets = [0, 11, 0], sizes = [8, 1, 19], strides = [1, 1, 1]} : vector<8x16x19xf32> to vector<8x1x19xf32>
    %12 = tpu.concatenate %5, %6, %7, %4, %8, %9, %10, %11 in 1 : vector<8x1x19xf32>, vector<8x1x19xf32>, vector<8x1x19xf32>, vector<8x16x19xf32>, vector<8x1x19xf32>, vector<8x1x19xf32>, vector<8x1x19xf32>, vector<8x1x19xf32> -> vector<8x23x19xf32>
    %c0_2 = arith.constant 0 : index
    %c0_3 = arith.constant 0 : index
    %c0_4 = arith.constant 0 : index
    %13 = vector.load %arg2[%c0_2, %c0_3, %c0_4] : memref<8x23x19xf32, #tpu.memory_space<vmem>>, vector<8x23x19xf32>
    tpu.vector_store %arg2[%c0_2, %c0_3, %c0_4], %12 {strides = array<i32>} : memref<8x23x19xf32, #tpu.memory_space<vmem>>, vector<8x23x19xf32>,
    return
  }
  func.func @transform_0(%arg0: i32) -> (i32, i32, i32) {
    %c0_i32 = arith.constant 0 : i32
    %c0_i32_0 = arith.constant 0 : i32
    %c0_i32_1 = arith.constant 0 : i32
    return %arg0, %c0_i32, %c0_i32_0 : i32, i32, i32
  }
  func.func @transform_1(%arg0: i32) -> (i32, i32, i32) {
    %c0_i32 = arith.constant 0 : i32
    %c0_i32_0 = arith.constant 0 : i32
    %c0_i32_1 = arith.constant 0 : i32
    return %arg0, %c0_i32, %c0_i32_0 : i32, i32, i32
  }
}

</mosaic_0001>

<llo_original>
// kernel: tpu_custom_call.1
$region0: #{tpu_custom_call.1}
  #allocation0 [shape = 'u32[]', space=smem, size = 0x4, offset = 0x4, fixed_abs, tag = 'smem constant byte address 0x4 - core index']
  #allocation1 [shape = 'u32[144,128]{1,0:T(1,128)}', space=vmem, size = 0x12000, scoped, tag = 'internal scratch']
  %s0 = inlined_call_operand.hbm [shape: f32[8,16,16], index: 0, kind: input, shape index: {}]
  %s1 = inlined_call_operand.vmem [shape: f32[8,23,19], index: 1, kind: output, shape index: {}]
  %s2 = sld [smem:[#allocation0]]
  $region18: #{tpu_custom_call.1} parent=0
    _
  %s4 = ssub.s32 1, %s2
  %s5 = scalar_select 0, %s4, %s2
  $region1: #{tpu_custom_call.1} parent=0
    #allocation2 [shape = 'u8[65536]{0}', space=vmem, size = 0x10000, scoped, tag = 'input window, operand 0, single buffered']
    #allocation3 [shape = 's32[1]{0}', space=sflag, size = 0x4, scoped, tag = 'scoped memory for tpu_custom_call.1']
    %6 = vsyncpa [#allocation3], 0
    // Predicated region
    $region2: #{tpu_custom_call.1} parent=1 // pred_check
      _
    $region3: #{tpu_custom_call.1} parent=1 // pred_check_branch
      %8 = sbr.rel (0) target = $region5
    $region4: #{tpu_custom_call.1} parent=1 // pred_region
      %s10 = ssub.s32 2048, 2048
      %11 = vsyncadd [#allocation3], %s10
      %s12 = sshll.u32 [#allocation2], 4
      %s13 = int_to_ptr.vmem [resolvable:$true] %s12
      %18 = dma.hbm_to_vmem [thread:$0]  %s0, 2048, %s13, [#allocation3], 128, 128, 8
    $region5: #{tpu_custom_call.1} parent=1 // pred_fallthru
      _
    // Predicated region
    $region6: #{tpu_custom_call.1} parent=1 // pred_check
      _
    $region7: #{tpu_custom_call.1} parent=1 // pred_check_branch
      %20 = sbr.rel (0) target = $region9
    $region8: #{tpu_custom_call.1} parent=1 // pred_region
      %21 = dma.done [#allocation3], 2048
    $region9: #{tpu_custom_call.1} parent=1 // pred_fallthru
      _
    %v22 = vld [vmem:[#allocation2] sm:$0xff]
    %v23 = vld [vmem:[#allocation2 + $0x8] sm:$0xff]
    %v24 = vld [vmem:[#allocation2 + $0x10] sm:$0xff]
    %v25 = vld [vmem:[#allocation2 + $0x18] sm:$0xff]
    %v26 = vld [vmem:[#allocation2 + $0x20] sm:$0xff]
    %v27 = vld [vmem:[#allocation2 + $0x28] sm:$0xff]
    %v28 = vld [vmem:[#allocation2 + $0x30] sm:$0xff]
    %v29 = vld [vmem:[#allocation2 + $0x38] sm:$0xff]
    %v30 = vld [vmem:[#allocation2 + $0x40] sm:$0xff]
    %v31 = vld [vmem:[#allocation2 + $0x48] sm:$0xff]
    %v32 = vld [vmem:[#allocation2 + $0x50] sm:$0xff]
    %v33 = vld [vmem:[#allocation2 + $0x58] sm:$0xff]
    %v34 = vld [vmem:[#allocation2 + $0x60] sm:$0xff]
    %v35 = vld [vmem:[#allocation2 + $0x68] sm:$0xff]
    %v36 = vld [vmem:[#allocation2 + $0x70] sm:$0xff]
    %v37 = vld [vmem:[#allocation2 + $0x78] sm:$0xff]
    %54 = vrot.lane.b32.xlu0 %v22, 127
    %v55 = vpop.permute.xlu0 %54
    %56 = vrot.lane.b32.xlu0 %v23, 127
    %v57 = vpop.permute.xlu0 %56
    %58 = vrot.lane.b32.xlu0 %v24, 127
    %v59 = vpop.permute.xlu0 %58
    %60 = vrot.lane.b32.xlu0 %v25, 127
    %v61 = vpop.permute.xlu0 %60
    %62 = vrot.lane.b32.xlu0 %v26, 127
    %v63 = vpop.permute.xlu0 %62
    %64 = vrot.lane.b32.xlu0 %v27, 127
    %v65 = vpop.permute.xlu0 %64
    %66 = vrot.lane.b32.xlu0 %v28, 127
    %v67 = vpop.permute.xlu0 %66
    %68 = vrot.lane.b32.xlu0 %v29, 127
    %v69 = vpop.permute.xlu0 %68
    %70 = vrot.lane.b32.xlu0 %v30, 127
    %v71 = vpop.permute.xlu0 %70
    %72 = vrot.lane.b32.xlu0 %v31, 127
    %v73 = vpop.permute.xlu0 %72
    %74 = vrot.lane.b32.xlu0 %v32, 127
    %v75 = vpop.permute.xlu0 %74
    %76 = vrot.lane.b32.xlu0 %v33, 127
    %v77 = vpop.permute.xlu0 %76
    %78 = vrot.lane.b32.xlu0 %v34, 127
    %v79 = vpop.permute.xlu0 %78
    %80 = vrot.lane.b32.xlu0 %v35, 127
    %v81 = vpop.permute.xlu0 %80
    %82 = vrot.lane.b32.xlu0 %v36, 127
    %v83 = vpop.permute.xlu0 %82
    %84 = vrot.lane.b32.xlu0 %v37, 127
    %v85 = vpop.permute.xlu0 %84
    %102 = vrot.lane.b32.xlu0 %v22, 1
    %v103 = vpop.permute.xlu0 %102
    %104 = vrot.lane.b32.xlu0 %v23, 1
    %v105 = vpop.permute.xlu0 %104
    %106 = vrot.lane.b32.xlu0 %v24, 1
    %v107 = vpop.permute.xlu0 %106
    %108 = vrot.lane.b32.xlu0 %v25, 1
    %v109 = vpop.permute.xlu0 %108
    %110 = vrot.lane.b32.xlu0 %v26, 1
    %v111 = vpop.permute.xlu0 %110
    %112 = vrot.lane.b32.xlu0 %v27, 1
    %v113 = vpop.permute.xlu0 %112
    %114 = vrot.lane.b32.xlu0 %v28, 1
    %v115 = vpop.permute.xlu0 %114
    %116 = vrot.lane.b32.xlu0 %v29, 1
    %v117 = vpop.permute.xlu0 %116
    %118 = vrot.lane.b32.xlu0 %v30, 1
    %v119 = vpop.permute.xlu0 %118
    %120 = vrot.lane.b32.xlu0 %v31, 1
    %v121 = vpop.permute.xlu0 %120
    %122 = vrot.lane.b32.xlu0 %v32, 1
    %v123 = vpop.permute.xlu0 %122
    %124 = vrot.lane.b32.xlu0 %v33, 1
    %v125 = vpop.permute.xlu0 %124
    %126 = vrot.lane.b32.xlu0 %v34, 1
    %v127 = vpop.permute.xlu0 %126
    %128 = vrot.lane.b32.xlu0 %v35, 1
    %v129 = vpop.permute.xlu0 %128
    %130 = vrot.lane.b32.xlu0 %v36, 1
    %v131 = vpop.permute.xlu0 %130
    %132 = vrot.lane.b32.xlu0 %v37, 1
    %v133 = vpop.permute.xlu0 %132
    %150 = vrot.lane.b32.xlu0 %v22, 3
    %v151 = vpop.permute.xlu0 %150
    %152 = vrot.lane.b32.xlu0 %v23, 3
    %v153 = vpop.permute.xlu0 %152
    %154 = vrot.lane.b32.xlu0 %v24, 3
    %v155 = vpop.permute.xlu0 %154
    %156 = vrot.lane.b32.xlu0 %v25, 3
    %v157 = vpop.permute.xlu0 %156
    %158 = vrot.lane.b32.xlu0 %v26, 3
    %v159 = vpop.permute.xlu0 %158
    %160 = vrot.lane.b32.xlu0 %v27, 3
    %v161 = vpop.permute.xlu0 %160
    %162 = vrot.lane.b32.xlu0 %v28, 3
    %v163 = vpop.permute.xlu0 %162
    %164 = vrot.lane.b32.xlu0 %v29, 3
    %v165 = vpop.permute.xlu0 %164
    %166 = vrot.lane.b32.xlu0 %v30, 3
    %v167 = vpop.permute.xlu0 %166
    %168 = vrot.lane.b32.xlu0 %v31, 3
    %v169 = vpop.permute.xlu0 %168
    %170 = vrot.lane.b32.xlu0 %v32, 3
    %v171 = vpop.permute.xlu0 %170
    %172 = vrot.lane.b32.xlu0 %v33, 3
    %v173 = vpop.permute.xlu0 %172
    %174 = vrot.lane.b32.xlu0 %v34, 3
    %v175 = vpop.permute.xlu0 %174
    %176 = vrot.lane.b32.xlu0 %v35, 3
    %v177 = vpop.permute.xlu0 %176
    %178 = vrot.lane.b32.xlu0 %v36, 3
    %v179 = vpop.permute.xlu0 %178
    %180 = vrot.lane.b32.xlu0 %v37, 3
    %v181 = vpop.permute.xlu0 %180
    %198 = vrot.lane.b32.xlu0 %v22, 5
    %v199 = vpop.permute.xlu0 %198
    %200 = vrot.lane.b32.xlu0 %v23, 5
    %v201 = vpop.permute.xlu0 %200
    %202 = vrot.lane.b32.xlu0 %v24, 5
    %v203 = vpop.permute.xlu0 %202
    %204 = vrot.lane.b32.xlu0 %v25, 5
    %v205 = vpop.permute.xlu0 %204
    %206 = vrot.lane.b32.xlu0 %v26, 5
    %v207 = vpop.permute.xlu0 %206
    %208 = vrot.lane.b32.xlu0 %v27, 5
    %v209 = vpop.permute.xlu0 %208
    %210 = vrot.lane.b32.xlu0 %v28, 5
    %v211 = vpop.permute.xlu0 %210
    %212 = vrot.lane.b32.xlu0 %v29, 5
    %v213 = vpop.permute.xlu0 %212
    %214 = vrot.lane.b32.xlu0 %v30, 5
    %v215 = vpop.permute.xlu0 %214
    %216 = vrot.lane.b32.xlu0 %v31, 5
    %v217 = vpop.permute.xlu0 %216
    %218 = vrot.lane.b32.xlu0 %v32, 5
    %v219 = vpop.permute.xlu0 %218
    %220 = vrot.lane.b32.xlu0 %v33, 5
    %v221 = vpop.permute.xlu0 %220
    %222 = vrot.lane.b32.xlu0 %v34, 5
    %v223 = vpop.permute.xlu0 %222
    %224 = vrot.lane.b32.xlu0 %v35, 5
    %v225 = vpop.permute.xlu0 %224
    %226 = vrot.lane.b32.xlu0 %v36, 5
    %v227 = vpop.permute.xlu0 %226
    %228 = vrot.lane.b32.xlu0 %v37, 5
    %v229 = vpop.permute.xlu0 %228
    %vm246 = vcmask 7168
    %v247 = vsel %vm246, %v55, %v103
    %v248 = vsel %vm246, %v57, %v105
    %v249 = vsel %vm246, %v59, %v107
    %v250 = vsel %vm246, %v61, %v109
    %v251 = vsel %vm246, %v63, %v111
    %v252 = vsel %vm246, %v65, %v113
    %v253 = vsel %vm246, %v67, %v115
    %v254 = vsel %vm246, %v69, %v117
    %v255 = vsel %vm246, %v71, %v119
    %v256 = vsel %vm246, %v73, %v121
    %v257 = vsel %vm246, %v75, %v123
    %v258 = vsel %vm246, %v77, %v125
    %v259 = vsel %vm246, %v79, %v127
    %v260 = vsel %vm246, %v81, %v129
    %v261 = vsel %vm246, %v83, %v131
    %v262 = vsel %vm246, %v85, %v133
    %vm263 = vcmask 138240
    %v264 = vsel %vm263, %v247, %v151
    %v265 = vsel %vm263, %v248, %v153
    %v266 = vsel %vm263, %v249, %v155
    %v267 = vsel %vm263, %v250, %v157
    %v268 = vsel %vm263, %v251, %v159
    %v269 = vsel %vm263, %v252, %v161
    %v270 = vsel %vm263, %v253, %v163
    %v271 = vsel %vm263, %v254, %v165
    %v272 = vsel %vm263, %v255, %v167
    %v273 = vsel %vm263, %v256, %v169
    %v274 = vsel %vm263, %v257, %v171
    %v275 = vsel %vm263, %v258, %v173
    %v276 = vsel %vm263, %v259, %v175
    %v277 = vsel %vm263, %v260, %v177
    %v278 = vsel %vm263, %v261, %v179
    %v279 = vsel %vm263, %v262, %v181
    %vm280 = vcmask 146432
    %v281 = vsel %vm280, %v264, %v199
    %v282 = vsel %vm280, %v265, %v201
    %v283 = vsel %vm280, %v266, %v203
    %v284 = vsel %vm280, %v267, %v205
    %v285 = vsel %vm280, %v268, %v207
    %v286 = vsel %vm280, %v269, %v209
    %v287 = vsel %vm280, %v270, %v211
    %v288 = vsel %vm280, %v271, %v213
    %v289 = vsel %vm280, %v272, %v215
    %v290 = vsel %vm280, %v273, %v217
    %v291 = vsel %vm280, %v274, %v219
    %v292 = vsel %vm280, %v275, %v221
    %v293 = vsel %vm280, %v276, %v223
    %v294 = vsel %vm280, %v277, %v225
    %v295 = vsel %vm280, %v278, %v227
    %v296 = vsel %vm280, %v279, %v229
    %v305 = vrot.slane %v281, 3
    %v306 = vrot.slane %v283, 3
    %v307 = vrot.slane %v285, 3
    %v308 = vrot.slane %v287, 3
    %v309 = vrot.slane %v289, 3
    %v310 = vrot.slane %v291, 3
    %v311 = vrot.slane %v293, 3
    %v312 = vrot.slane %v295, 3
    %v321 = vrot.slane %v281, 1
    %v322 = vrot.slane %v283, 1
    %v323 = vrot.slane %v285, 1
    %v324 = vrot.slane %v287, 1
    %v325 = vrot.slane %v289, 1
    %v326 = vrot.slane %v291, 1
    %v327 = vrot.slane %v293, 1
    %v328 = vrot.slane %v295, 1
    %v337 = vrot.slane %v281, 7
    %v338 = vrot.slane %v283, 7
    %v339 = vrot.slane %v285, 7
    %v340 = vrot.slane %v287, 7
    %v341 = vrot.slane %v289, 7
    %v342 = vrot.slane %v291, 7
    %v343 = vrot.slane %v293, 7
    %v344 = vrot.slane %v295, 7
    %vm361 = vcmask 1042432
    %v362 = vrot.slane %v281, 5
    %v363 = vrot.slane %v282, 5
    %v364 = vsel %vm361, %v362, %v363
    %v365 = vrot.slane %v283, 5
    %v366 = vrot.slane %v284, 5
    %v367 = vsel %vm361, %v365, %v366
    %v368 = vrot.slane %v285, 5
    %v369 = vrot.slane %v286, 5
    %v370 = vsel %vm361, %v368, %v369
    %v371 = vrot.slane %v287, 5
    %v372 = vrot.slane %v288, 5
    %v373 = vsel %vm361, %v371, %v372
    %v374 = vrot.slane %v289, 5
    %v375 = vrot.slane %v290, 5
    %v376 = vsel %vm361, %v374, %v375
    %v377 = vrot.slane %v291, 5
    %v378 = vrot.slane %v292, 5
    %v379 = vsel %vm361, %v377, %v378
    %v380 = vrot.slane %v293, 5
    %v381 = vrot.slane %v294, 5
    %v382 = vsel %vm361, %v380, %v381
    %v383 = vrot.slane %v295, 5
    %v384 = vrot.slane %v296, 5
    %v385 = vsel %vm361, %v383, %v384
    %v410 = vrot.slane %v282, 3
    %v411 = vrot.slane %v284, 3
    %v412 = vrot.slane %v286, 3
    %v413 = vrot.slane %v288, 3
    %v414 = vrot.slane %v290, 3
    %v415 = vrot.slane %v292, 3
    %v416 = vrot.slane %v294, 3
    %v417 = vrot.slane %v296, 3
    %v426 = vrot.slane %v282, 1
    %v427 = vrot.slane %v284, 1
    %v428 = vrot.slane %v286, 1
    %v429 = vrot.slane %v288, 1
    %v430 = vrot.slane %v290, 1
    %v431 = vrot.slane %v292, 1
    %v432 = vrot.slane %v294, 1
    %v433 = vrot.slane %v296, 1
    %v442 = vrot.slane %v282, 7
    %v443 = vrot.slane %v284, 7
    %v444 = vrot.slane %v286, 7
    %v445 = vrot.slane %v288, 7
    %v446 = vrot.slane %v290, 7
    %v447 = vrot.slane %v292, 7
    %v448 = vrot.slane %v294, 7
    %v449 = vrot.slane %v296, 7
    %vm458 = vcmask 1040384
    %v459 = vsel %vm458, %v305, %v321
    %v460 = vsel %vm458, %v306, %v322
    %v461 = vsel %vm458, %v307, %v323
    %v462 = vsel %vm458, %v308, %v324
    %v463 = vsel %vm458, %v309, %v325
    %v464 = vsel %vm458, %v310, %v326
    %v465 = vsel %vm458, %v311, %v327
    %v466 = vsel %vm458, %v312, %v328
    %vm467 = vcmask 1041408
    %v468 = vsel %vm467, %v459, %v337
    %v469 = vsel %vm467, %v460, %v338
    %v470 = vsel %vm467, %v461, %v339
    %v471 = vsel %vm467, %v462, %v340
    %v472 = vsel %vm467, %v463, %v341
    %v473 = vsel %vm467, %v464, %v342
    %v474 = vsel %vm467, %v465, %v343
    %v475 = vsel %vm467, %v466, %v344
    %v476 = vsel %vm361, %v468, %v362
    %v477 = vsel %vm361, %v469, %v365
    %v478 = vsel %vm361, %v470, %v368
    %v479 = vsel %vm361, %v471, %v371
    %v480 = vsel %vm361, %v472, %v374
    %v481 = vsel %vm361, %v473, %v377
    %v482 = vsel %vm361, %v474, %v380
    %v483 = vsel %vm361, %v475, %v383
    %v484 = vsel %vm361, %v363, %v410
    %v485 = vsel %vm361, %v366, %v411
    %v486 = vsel %vm361, %v369, %v412
    %v487 = vsel %vm361, %v372, %v413
    %v488 = vsel %vm361, %v375, %v414
    %v489 = vsel %vm361, %v378, %v415
    %v490 = vsel %vm361, %v381, %v416
    %v491 = vsel %vm361, %v384, %v417
    %vm492 = vcmask 1043456
    %v493 = vsel %vm492, %v484, %v426
    %v494 = vsel %vm492, %v485, %v427
    %v495 = vsel %vm492, %v486, %v428
    %v496 = vsel %vm492, %v487, %v429
    %v497 = vsel %vm492, %v488, %v430
    %v498 = vsel %vm492, %v489, %v431
    %v499 = vsel %vm492, %v490, %v432
    %v500 = vsel %vm492, %v491, %v433
    %vm501 = vcmask 1044480
    %v502 = vsel %vm501, %v493, %v442
    %v503 = vsel %vm501, %v494, %v443
    %v504 = vsel %vm501, %v495, %v444
    %v505 = vsel %vm501, %v496, %v445
    %v506 = vsel %vm501, %v497, %v446
    %v507 = vsel %vm501, %v498, %v447
    %v508 = vsel %vm501, %v499, %v448
    %v509 = vsel %vm501, %v500, %v449
    %vm510 = vcmask 1045504
    %v511 = vsel %vm510, %v502, %v363
    %v512 = vsel %vm510, %v503, %v366
    %v513 = vsel %vm510, %v504, %v369
    %v514 = vsel %vm510, %v505, %v372
    %v515 = vsel %vm510, %v506, %v375
    %v516 = vsel %vm510, %v507, %v378
    %v517 = vsel %vm510, %v508, %v381
    %v518 = vsel %vm510, %v509, %v384
    %vm519 = vcmask 154624
    %520 = vst.msk [vmem:[%s1] sm:$0xff] %vm519, %v476
    %521 = vst.msk [vmem:[%s1 + $0x8] sm:$0xff] %vm519, %v364
    %vm522 = vcmask 153600
    %523 = vst.msk [vmem:[%s1 + $0x10] sm:$0x7f] %vm522, %v511
    %524 = vst.msk [vmem:[%s1 + $0x18] sm:$0xff] %vm519, %v477
    %525 = vst.msk [vmem:[%s1 + $0x20] sm:$0xff] %vm519, %v367
    %526 = vst.msk [vmem:[%s1 + $0x28] sm:$0x7f] %vm522, %v512
    %527 = vst.msk [vmem:[%s1 + $0x30] sm:$0xff] %vm519, %v478
    %528 = vst.msk [vmem:[%s1 + $0x38] sm:$0xff] %vm519, %v370
    %529 = vst.msk [vmem:[%s1 + $0x40] sm:$0x7f] %vm522, %v513
    %530 = vst.msk [vmem:[%s1 + $0x48] sm:$0xff] %vm519, %v479
    %531 = vst.msk [vmem:[%s1 + $0x50] sm:$0xff] %vm519, %v373
    %532 = vst.msk [vmem:[%s1 + $0x58] sm:$0x7f] %vm522, %v514
    %533 = vst.msk [vmem:[%s1 + $0x60] sm:$0xff] %vm519, %v480
    %534 = vst.msk [vmem:[%s1 + $0x68] sm:$0xff] %vm519, %v376
    %535 = vst.msk [vmem:[%s1 + $0x70] sm:$0x7f] %vm522, %v515
    %536 = vst.msk [vmem:[%s1 + $0x78] sm:$0xff] %vm519, %v481
    %537 = vst.msk [vmem:[%s1 + $0x80] sm:$0xff] %vm519, %v379
    %538 = vst.msk [vmem:[%s1 + $0x88] sm:$0x7f] %vm522, %v516
    %539 = vst.msk [vmem:[%s1 + $0x90] sm:$0xff] %vm519, %v482
    %540 = vst.msk [vmem:[%s1 + $0x98] sm:$0xff] %vm519, %v382
    %541 = vst.msk [vmem:[%s1 + $0xa0] sm:$0x7f] %vm522, %v517
    %542 = vst.msk [vmem:[%s1 + $0xa8] sm:$0xff] %vm519, %v483
    %543 = vst.msk [vmem:[%s1 + $0xb0] sm:$0xff] %vm519, %v385
    %544 = vst.msk [vmem:[%s1 + $0xb8] sm:$0x7f] %vm522, %v518
    // Predicated region
    $region10: #{tpu_custom_call.1} parent=1 // pred_check
      _
    $region11: #{tpu_custom_call.1} parent=1 // pred_check_branch
      %546 = sbr.rel (0) target = $region13
    $region12: #{tpu_custom_call.1} parent=1 // pred_region
      _
    $region13: #{tpu_custom_call.1} parent=1 // pred_fallthru
      _
    // Predicated region
    $region14: #{tpu_custom_call.1} parent=1 // pred_check
      _
    $region15: #{tpu_custom_call.1} parent=1 // pred_check_branch
      %548 = sbr.rel (0) target = $region17
    $region16: #{tpu_custom_call.1} parent=1 // pred_region
      _
    $region17: #{tpu_custom_call.1} parent=1 // pred_fallthru
      _
    %549 = vsyncpa [#allocation3], 1

</llo_original>
